<compile_context>
chip_gen: v6e
topology: v6e:2x2x1
jax: 0.10.0
libtpu: 0.0.40
codegen_flags: <defaults>
</compile_context>

<pallas_src>
import functools
import math

import jax
import jax.numpy as jnp
from jax.experimental import pallas as pl
from jax.experimental.pallas import tpu as pltpu


def _round_up(x, m):
    return ((x + m - 1) // m) * m


def _time_embedding_kernel(t_ref, out_ref, *, half, dim, k):
    # inv_freq generated in-kernel: a (1, half) iota + one EUP exp per tile.
    j = jax.lax.broadcasted_iota(jnp.int32, (1, half), 1).astype(jnp.float32)
    inv_freq = jnp.exp(j * (-2.0 * math.log(10000.0) / dim))        # (1, half)

    # k logical rows are packed along the lane axis of one stored row:
    # packed[g, r*dim:(r+1)*dim] == [sin(t[g*k+r]*f), cos(t[g*k+r]*f)].
    # (On v5e, if sin/cos lower to VALU polynomials, the shared range
    #  reduction between sin and cos of the same argument could be dedup'd;
    #  here the kernel is HBM-store bound so the VALU work is hidden.)
    pieces = []
    for r in range(k):                                              # k is small & static
        t_r = t_ref[:, r:r + 1]                                     # (tb, 1)
        pos = t_r * inv_freq                                        # (tb, half) f32
        pieces.append(jnp.sin(pos))
        pieces.append(jnp.cos(pos))

    # ONE full-block, lane-dense store (k*dim is a multiple of 128 whenever
    # the packed path is active; otherwise dim is already lane-aligned or we
    # fall back to the full-array-dim block).
    out_ref[...] = jnp.concatenate(pieces, axis=-1).astype(out_ref.dtype)


def time_embedding(t, dim, *, tb=None, out_dtype=jnp.float32):
    """Sinusoidal timestep embedding.

    t: (B,) float -> (B, dim) = cat([sin(t*inv_freq), cos(t*inv_freq)], -1).
    out_dtype=jnp.bfloat16 is the fast path (halves HBM writeback bytes) when
    the consumer (time-MLP) tolerates it; default f32 matches the PyTorch ref.
    """
    assert dim % 2 == 0, "dim must be even"
    B = t.shape[0]
    half = dim // 2

    # Lane-packing factor: fold k rows so the stored width k*dim % 128 == 0.
    k = 1
    if dim % 128 != 0:
        kk = 128 // math.gcd(dim, 128)
        if kk <= 8 and B % kk == 0:
            k = kk
    Bg = B // k

    t_in = t.astype(jnp.float32).reshape(Bg, k)          # free reshape, no pad

    out_itemsize = jnp.dtype(out_dtype).itemsize
    if Bg <= 8:
        # Single full block (block dims equal to the full array dims are
        # always legal regardless of (8,128) divisibility).
        tb = Bg
    else:
        if tb is None:
            # ~8 MiB double-buffered budget (v7x-safe under its 32 MiB scoped
            # VMEM); per-row cost = output row + lane-padded (tb,k)->(tb,128)
            # f32 input row.
            row_bytes = k * dim * out_itemsize + 128 * 4
            tb = (8 << 20) // (2 * row_bytes)
            tb = max(8, min(2048, tb))
            # >= 2 grid tiles so "parallel" shards batch tiles across both
            # TensorCores on v7x (no-op on v5e/v6e).
            tb = min(tb, _round_up(-(-Bg // 2), 8))
        # Multiple of 8 sublanes, never larger than the array.
        tb = max(8, min((tb // 8) * 8, (Bg // 8) * 8))

    grid = (pl.cdiv(Bg, tb),)                            # ragged final block OK

    kernel = functools.partial(_time_embedding_kernel, half=half, dim=dim, k=k)

    out = pl.pallas_call(
        kernel,
        out_shape=jax.ShapeDtypeStruct((Bg, k * dim), out_dtype),
        grid=grid,
        in_specs=[pl.BlockSpec((tb, k), lambda i: (i, 0))],
        out_specs=pl.BlockSpec((tb, k * dim), lambda i: (i, 0)),
        compiler_params=pltpu.CompilerParams(
            dimension_semantics=("parallel",),
        ),
    )(t_in)

    # Contiguous (row-major) reshape back to the logical layout — free in XLA,
    # no extra HBM pass (unlike the old pad + out[:B] slice).
    return out.reshape(B, dim)


def time_embedding_ref(t, dim):
    # Pure-JAX mirror of the PyTorch module.
    inv_freq = jnp.exp(
        jnp.arange(0, dim, 2, dtype=jnp.float32) * (-math.log(10000.0) / dim)
    )
    pos = t[:, None].astype(jnp.float32) * inv_freq[None, :]
    return jnp.concatenate([jnp.sin(pos), jnp.cos(pos)], axis=-1)


if __name__ == "__main__":
    key = jax.random.PRNGKey(0)
    k1, k2, k3, k4, k5 = jax.random.split(key, 5)

    # (1) Small timesteps, dim=32 (packed path, k=4, single full block).
    dim, B = 32, 8
    t_small = jax.random.uniform(k1, (B,), jnp.float32, 0.0, 10.0)
    out_small = jax.block_until_ready(time_embedding(t_small, dim))
    ref_small = time_embedding_ref(t_small, dim)
    assert out_small.shape == (B, dim), out_small.shape
    assert jnp.allclose(out_small, ref_small, atol=1e-4, rtol=1e-4), "mismatch (small t)"

    # (2) Realistic diffusion timesteps (up to 1000): the in-kernel EUP exp
    #     for inv_freq can differ from XLA's exp by ~1 ulp; that relative
    #     difference is amplified by |t| inside sin/cos -> looser atol.
    t_big = jax.random.uniform(k2, (B,), jnp.float32, 0.0, 1000.0)
    out_big = jax.block_until_ready(time_embedding(t_big, dim))
    ref_big = time_embedding_ref(t_big, dim)
    assert jnp.allclose(out_big, ref_big, atol=2e-3, rtol=1e-3), "mismatch (large t)"

    # (3) B=20, dim=32: packed (k=4, Bg=5), single full non-multiple-of-8 block.
    t_rag = jax.random.uniform(k3, (20,), jnp.float32, 0.0, 1000.0)
    out_rag = jax.block_until_ready(time_embedding(t_rag, dim))
    ref_rag = time_embedding_ref(t_rag, dim)
    assert out_rag.shape == (20, dim), out_rag.shape
    assert jnp.allclose(out_rag, ref_rag, atol=2e-3, rtol=1e-3), "mismatch (B=20)"

    # (4) Packed + ragged grid: B=200, dim=32, forced tb=16 -> Bg=50, grid=4,
    #     last block has only 2 valid rows (masked final-block store).
    t_p = jax.random.uniform(k4, (200,), jnp.float32, 0.0, 1000.0)
    out_p = jax.block_until_ready(time_embedding(t_p, dim, tb=16))
    ref_p = time_embedding_ref(t_p, dim)
    assert out_p.shape == (200, dim), out_p.shape
    assert jnp.allclose(out_p, ref_p, atol=2e-3, rtol=1e-3), "mismatch (ragged grid)"

    # (5) Lane-aligned dim (no packing) + ragged grid + bf16 fast path:
    #     B=52, dim=256 -> k=1, >=2 grid tiles, final block ragged.
    t_a = jax.random.uniform(k5, (52,), jnp.float32, 0.0, 1000.0)
    out_a32 = jax.block_until_ready(time_embedding(t_a, 256))
    out_a16 = jax.block_until_ready(time_embedding(t_a, 256, out_dtype=jnp.bfloat16))
    ref_a = time_embedding_ref(t_a, 256)
    assert out_a32.shape == (52, 256), out_a32.shape
    assert jnp.allclose(out_a32, ref_a, atol=2e-3, rtol=1e-3), "mismatch (dim=256)"
    assert jnp.allclose(out_a16.astype(jnp.float32), ref_a, atol=2e-2, rtol=2e-2), \
        "mismatch (bf16 fast path)"

    print("KERNEL_OK")
</pallas_src>

<mosaic_0001>
module attributes {stable_mosaic.version = 11 : i64} {
  func.func @_time_embedding_kernel(%arg0: i32, %arg1: memref<2x4xf32, #tpu.memory_space<vmem>>, %arg2: memref<2x128xf32, #tpu.memory_space<vmem>>) attributes {dimension_semantics = [#tpu.dimension_semantics<parallel>], iteration_bounds = array<i64: 1>, scalar_prefetch = 0 : i64, scratch_operands = 0 : i64, tpu.core_type = #tpu.core_type<tc>, window_params = [{transform_indices = @transform_0, window_bounds = array<i64: 2, 4>}, {transform_indices = @transform_1, window_bounds = array<i64: 2, 128>}]} {
    %0 = tpu.iota {dimensions = array<i32: 1>} : vector<1x16xi32>
    %1 = arith.sitofp %0 : vector<1x16xi32> to vector<1x16xf32>
    %cst = arith.constant -0.575646281 : f32
    %2 = vector.broadcast %cst : f32 to vector<1x16xf32>
    %3 = arith.mulf %1, %2 : vector<1x16xf32>
    %4 = math.exp %3 : vector<1x16xf32>
    %c0 = arith.constant 0 : index
    %c0_0 = arith.constant 0 : index
    %5 = vector.load %arg1[%c0, %c0_0] : memref<2x4xf32, #tpu.memory_space<vmem>>, vector<2x1xf32>
    %6 = vector.broadcast %5 : vector<2x1xf32> to vector<2x16xf32>
    %7 = vector.broadcast %4 : vector<1x16xf32> to vector<2x16xf32>
    %8 = arith.mulf %6, %7 : vector<2x16xf32>
    %9 = math.sin %8 : vector<2x16xf32>
    %10 = math.cos %8 : vector<2x16xf32>
    %c0_1 = arith.constant 0 : index
    %c1 = arith.constant 1 : index
    %11 = vector.load %arg1[%c0_1, %c1] : memref<2x4xf32, #tpu.memory_space<vmem>>, vector<2x1xf32>
    %12 = vector.broadcast %11 : vector<2x1xf32> to vector<2x16xf32>
    %13 = vector.broadcast %4 : vector<1x16xf32> to vector<2x16xf32>
    %14 = arith.mulf %12, %13 : vector<2x16xf32>
    %15 = math.sin %14 : vector<2x16xf32>
    %16 = math.cos %14 : vector<2x16xf32>
    %c0_2 = arith.constant 0 : index
    %c2 = arith.constant 2 : index
    %17 = vector.load %arg1[%c0_2, %c2] : memref<2x4xf32, #tpu.memory_space<vmem>>, vector<2x1xf32>
    %18 = vector.broadcast %17 : vector<2x1xf32> to vector<2x16xf32>
    %19 = vector.broadcast %4 : vector<1x16xf32> to vector<2x16xf32>
    %20 = arith.mulf %18, %19 : vector<2x16xf32>
    %21 = math.sin %20 : vector<2x16xf32>
    %22 = math.cos %20 : vector<2x16xf32>
    %c0_3 = arith.constant 0 : index
    %c3 = arith.constant 3 : index
    %23 = vector.load %arg1[%c0_3, %c3] : memref<2x4xf32, #tpu.memory_space<vmem>>, vector<2x1xf32>
    %24 = vector.broadcast %23 : vector<2x1xf32> to vector<2x16xf32>
    %25 = vector.broadcast %4 : vector<1x16xf32> to vector<2x16xf32>
    %26 = arith.mulf %24, %25 : vector<2x16xf32>
    %27 = math.sin %26 : vector<2x16xf32>
    %28 = math.cos %26 : vector<2x16xf32>
    %29 = tpu.concatenate %9, %10, %15, %16, %21, %22, %27, %28 in 1 : vector<2x16xf32>, vector<2x16xf32>, vector<2x16xf32>, vector<2x16xf32>, vector<2x16xf32>, vector<2x16xf32>, vector<2x16xf32>, vector<2x16xf32> -> vector<2x128xf32>
    %c0_4 = arith.constant 0 : index
    %c0_5 = arith.constant 0 : index
    %30 = vector.load %arg2[%c0_4, %c0_5] : memref<2x128xf32, #tpu.memory_space<vmem>>, vector<2x128xf32>
    tpu.vector_store %arg2[%c0_4, %c0_5], %29 {strides = array<i32>} : memref<2x128xf32, #tpu.memory_space<vmem>>, vector<2x128xf32>,
    return
  }
  func.func @transform_0(%arg0: i32) -> (i32, i32) {
    %c0_i32 = arith.constant 0 : i32
    %c0_i32_0 = arith.constant 0 : i32
    return %arg0, %c0_i32 : i32, i32
  }
  func.func @transform_1(%arg0: i32) -> (i32, i32) {
    %c0_i32 = arith.constant 0 : i32
    %c0_i32_0 = arith.constant 0 : i32
    return %arg0, %c0_i32 : i32, i32
  }
}

</mosaic_0001>

<llo_original>
// kernel: tpu_custom_call.1
$region0: #{tpu_custom_call.1}
  #allocation0 [shape = 'u32[]', space=smem, size = 0x4, offset = 0x4, fixed_abs, tag = 'smem constant byte address 0x4 - core index']
  #allocation1 [shape = 'u32[144,128]{1,0:T(1,128)}', space=vmem, size = 0x12000, scoped, tag = 'internal scratch']
  %s0 = inlined_call_operand.hbm [shape: f32[2,4], index: 0, kind: input, shape index: {}]
  %s1 = inlined_call_operand.hbm [shape: f32[2,128], index: 1, kind: output, shape index: {}]
  %s2 = sld [smem:[#allocation0]]
  $region18: #{tpu_custom_call.1} parent=0
    _
  %s4 = ssub.s32 1, %s2
  %s5 = scalar_select 0, %s4, %s2
  $region1: #{tpu_custom_call.1} parent=0
    #allocation2 [shape = 'u8[1024]{0}', space=vmem, size = 0x400, scoped, tag = 'input window, operand 0, single buffered']
    #allocation3 [shape = 's32[1]{0}', space=sflag, size = 0x4, scoped, tag = 'scoped memory for tpu_custom_call.1']
    #allocation4 [shape = 's32[1]{0}', space=sflag, size = 0x4, scoped, tag = 'scoped memory for tpu_custom_call.1']
    #allocation5 [shape = 'u8[1024]{0}', space=vmem, size = 0x400, scoped, tag = 'output window, operand 0, single buffered']
    %6 = vsyncpa [#allocation3], 0
    %7 = vsyncpa [#allocation4], 0
    // Predicated region
    $region2: #{tpu_custom_call.1} parent=1 // pred_check
      _
    $region3: #{tpu_custom_call.1} parent=1 // pred_check_branch
      %9 = sbr.rel (0) target = $region5
    $region4: #{tpu_custom_call.1} parent=1 // pred_region
      %s11 = ssub.s32 32, 32
      %12 = vsyncadd [#allocation3], %s11
      %s14 = sshll.u32 [#allocation2], 4
      %s15 = int_to_ptr.vmem [resolvable:$true] %s14
      %17 = dma.hbm_to_vmem [thread:$0]  %s0, 32, %s15, [#allocation3]
    $region5: #{tpu_custom_call.1} parent=1 // pred_fallthru
      _
    // Predicated region
    $region6: #{tpu_custom_call.1} parent=1 // pred_check
      _
    $region7: #{tpu_custom_call.1} parent=1 // pred_check_branch
      %19 = sbr.rel (0) target = $region9
    $region8: #{tpu_custom_call.1} parent=1 // pred_region
      %20 = dma.done [#allocation3], 32
    $region9: #{tpu_custom_call.1} parent=1 // pred_fallthru
      _
    %v21 = vlaneseq
    %v22 = vand.u32 %v21, 127
    %v23 = vcvt.s32.f32 %v22
    %v24 = vmul.f32 %v23, -0.5756463
    %v25 = vmul.f32 %v24, 1.442695
    %v26 = vpow.pop %v25
    %v27 = vld [vmem:[#allocation2] sm:$0x3]
    %29 = vset.pattern.permute.xlu0 0
    %30 = vperm.xlu0 %29, %v27
    %v31 = vpop.permute.xlu0 %30
    %v33 = vmul.f32 %v31, %v26
    %v34 = vand.u32 2147483647, %v33
    %vm35 = vcmp.le.f32.partialorder %v34, 0.7853982
    %vm36 = vcmp.lt.s32.totalorder %v33, 0
    %v37 = vand.u32 %v33, 2139095040
    %v38 = vshrl.u32 %v37, 23
    %v39 = vsub.s32 %v38, 127
    %v40 = vand.u32 2147483647, %v33
    %v41 = vand.u32 %v40, 8388607
    %v42 = vor.u32 %v41, 8388608
    %v43 = vsub.s32 0, %v42
    %v44 = vadd.s32 %v39, 1
    %vm45 = vcmp.gt.s32.totalorder %v44, 0
    %v46 = vsel %vm45, %v44, 0
    %v47 = vshrl.u32 %v46, 5
    %v48 = vand.u32 %v46, 31
    %v49 = vsub.s32 32, %v48
    %v50 = vshrl.u32 683565275, %v49
    %v51 = vshll.u32 683565275, %v48
    %v52 = vshrl.u32 2475754826, %v49
    %v53 = vor.u32 %v51, %v52
    %v54 = vshll.u32 2475754826, %v48
    %v55 = vshrl.u32 2131351028, %v49
    %v56 = vor.u32 %v54, %v55
    %v57 = vshll.u32 2131351028, %v48
    %v58 = vshrl.u32 2102212464, %v49
    %v59 = vor.u32 %v57, %v58
    %v60 = vshll.u32 2102212464, %v48
    %v61 = vshrl.u32 920167782, %v49
    %v62 = vor.u32 %v60, %v61
    %v63 = vshll.u32 920167782, %v48
    %v64 = vshrl.u32 1326507024, %v49
    %v65 = vor.u32 %v63, %v64
    %vm66 = vcmp.lt.s32.totalorder %v47, 1
    %vm67 = vcmp.lt.s32.totalorder %v47, 2
    %vm68 = vcmp.lt.s32.totalorder %v47, 3
    %vm69 = vcmp.lt.s32.totalorder %v47, 4
    %v70 = vsel %vm66, %v50, %v53
    %v71 = vsel %vm69, %v59, 2102212464
    %v72 = vsel %vm68, %v56, %v71
    %v73 = vsel %vm67, %v70, %v72
    %v74 = vsel %vm66, %v53, %v56
    %v75 = vsel %vm69, %v62, 920167782
    %v76 = vsel %vm68, %v59, %v75
    %v77 = vsel %vm67, %v74, %v76
    %v78 = vsel %vm66, %v56, %v59
    %v79 = vsel %vm69, %v65, 1326507024
    %v80 = vsel %vm68, %v62, %v79
    %v81 = vsel %vm67, %v78, %v80
    %v82 = vshll.u32 %v42, 8
    %v83 = vmul.u32.u64.compose %v82, %v81
    %v84 = vextract.low.u32 %v83
    %v85 = vextract.high.u32 %v83
    %v86 = vmul.u32.u64.compose %v82, %v77
    %v87 = vextract.low.u32 %v86
    %v88 = vextract.high.u32 %v86
    %v89 = vmul.u32 %v82, %v73
    %v90 = vadd.s32 %v85, %v87
    %vm91 = vc.u32 %v85, %v87
    %v92 = vadd.s32 %v88, 1
    %v93 = vsel %vm91, %v92, %v88
    %v94 = vadd.s32 %v89, %v93
    %v95 = vadd.s32 %v94, 536870912
    %v96 = vshrl.u32 %v95, 30
    %v97 = vshll.u32 %v96, 30
    %v98 = vsub.s32 %v94, %v97
    %vm99 = vcmp.lt.s32.totalorder %v98, 0
    %v100 = vsub.s32 0, %v98
    %v101 = vsel %vm99, %v100, %v98
    %v102 = vclz %v101
    %v103 = vsub.s32 %v102, 2
    %vm104 = vcmp.gt.s32.totalorder 0, %v103
    %v105 = vsel %vm104, 0, %v103
    %v106 = vsub.s32 32, %v105
    %v107 = vshll.u32 %v98, %v105
    %v108 = vshrl.u32 %v90, %v106
    %v109 = vor.u32 %v107, %v108
    %v110 = vsub.s32 4294967266, %v105
    %v111 = vadd.s32 %v110, 127
    %v112 = vshll.u32 %v111, 23
    %v113 = vor.u32 4788187, %v112
    %v114 = vand.u32 2147483647, %v113
    %v116 = vcvt.s32.f32 %v109
    %v117 = vmul.f32 %v116, %v114
    %v118 = vxor.u32 %v117, 2147483648
    %v119 = vsel %vm36, %v118, %v117
    %v120 = vsub.s32 4, %v96
    %v121 = vsel %vm36, %v120, %v96
    %v122 = vsel %vm35, %v33, %v119
    %v123 = vsel %vm35, 0, %v121
    %v124 = vcosq.f32.pop %v122
    %v125 = vsinq.f32.pop %v122
    %vm126 = vweird.f32 %v33
    %v127 = vadd.s32 %v123, 3
    %v128 = vand.u32 %v127, 3
    %vm129 = vcmp.lt.s32.totalorder %v128, 2
    %vm130 = vcmp.eq.s32.totalorder %v128, 0
    %v131 = vxor.u32 %v125, 2147483648
    %v132 = vsel %vm130, %v124, %v131
    %vm133 = vcmp.eq.s32.totalorder %v128, 2
    %v134 = vxor.u32 %v124, 2147483648
    %v135 = vsel %vm133, %v134, %v125
    %v136 = vsel %vm129, %v132, %v135
    %v137 = vsel %vm126, nan, %v136
    %v138 = vand.u32 2147483647, %v33
    %vm139 = vcmp.le.f32.partialorder %v138, 0.7853982
    %vm140 = vcmp.lt.s32.totalorder %v33, 0
    %v141 = vand.u32 %v33, 2139095040
    %v142 = vshrl.u32 %v141, 23
    %v143 = vsub.s32 %v142, 127
    %v144 = vand.u32 2147483647, %v33
    %v145 = vand.u32 %v144, 8388607
    %v146 = vor.u32 %v145, 8388608
    %v147 = vsub.s32 0, %v146
    %v148 = vadd.s32 %v143, 1
    %vm149 = vcmp.gt.s32.totalorder %v148, 0
    %v150 = vsel %vm149, %v148, 0
    %v151 = vshrl.u32 %v150, 5
    %v152 = vand.u32 %v150, 31
    %v153 = vsub.s32 32, %v152
    %v154 = vshrl.u32 683565275, %v153
    %v155 = vshll.u32 683565275, %v152
    %v156 = vshrl.u32 2475754826, %v153
    %v157 = vor.u32 %v155, %v156
    %v158 = vshll.u32 2475754826, %v152
    %v159 = vshrl.u32 2131351028, %v153
    %v160 = vor.u32 %v158, %v159
    %v161 = vshll.u32 2131351028, %v152
    %v162 = vshrl.u32 2102212464, %v153
    %v163 = vor.u32 %v161, %v162
    %v164 = vshll.u32 2102212464, %v152
    %v165 = vshrl.u32 920167782, %v153
    %v166 = vor.u32 %v164, %v165
    %v167 = vshll.u32 920167782, %v152
    %v168 = vshrl.u32 1326507024, %v153
    %v169 = vor.u32 %v167, %v168
    %vm170 = vcmp.lt.s32.totalorder %v151, 1
    %vm171 = vcmp.lt.s32.totalorder %v151, 2
    %vm172 = vcmp.lt.s32.totalorder %v151, 3
    %vm173 = vcmp.lt.s32.totalorder %v151, 4
    %v174 = vsel %vm170, %v154, %v157
    %v175 = vsel %vm173, %v163, 2102212464
    %v176 = vsel %vm172, %v160, %v175
    %v177 = vsel %vm171, %v174, %v176
    %v178 = vsel %vm170, %v157, %v160
    %v179 = vsel %vm173, %v166, 920167782
    %v180 = vsel %vm172, %v163, %v179
    %v181 = vsel %vm171, %v178, %v180
    %v182 = vsel %vm170, %v160, %v163
    %v183 = vsel %vm173, %v169, 1326507024
    %v184 = vsel %vm172, %v166, %v183
    %v185 = vsel %vm171, %v182, %v184
    %v186 = vshll.u32 %v146, 8
    %v187 = vmul.u32.u64.compose %v186, %v185
    %v188 = vextract.low.u32 %v187
    %v189 = vextract.high.u32 %v187
    %v190 = vmul.u32.u64.compose %v186, %v181
    %v191 = vextract.low.u32 %v190
    %v192 = vextract.high.u32 %v190
    %v193 = vmul.u32 %v186, %v177
    %v194 = vadd.s32 %v189, %v191
    %vm195 = vc.u32 %v189, %v191
    %v196 = vadd.s32 %v192, 1
    %v197 = vsel %vm195, %v196, %v192
    %v198 = vadd.s32 %v193, %v197
    %v199 = vadd.s32 %v198, 536870912
    %v200 = vshrl.u32 %v199, 30
    %v201 = vshll.u32 %v200, 30
    %v202 = vsub.s32 %v198, %v201
    %vm203 = vcmp.lt.s32.totalorder %v202, 0
    %v204 = vsub.s32 0, %v202
    %v205 = vsel %vm203, %v204, %v202
    %v206 = vclz %v205
    %v207 = vsub.s32 %v206, 2
    %vm208 = vcmp.gt.s32.totalorder 0, %v207
    %v209 = vsel %vm208, 0, %v207
    %v210 = vsub.s32 32, %v209
    %v211 = vshll.u32 %v202, %v209
    %v212 = vshrl.u32 %v194, %v210
    %v213 = vor.u32 %v211, %v212
    %v214 = vsub.s32 4294967266, %v209
    %v215 = vadd.s32 %v214, 127
    %v216 = vshll.u32 %v215, 23
    %v217 = vor.u32 4788187, %v216
    %v218 = vand.u32 2147483647, %v217
    %v220 = vcvt.s32.f32 %v213
    %v221 = vmul.f32 %v220, %v218
    %v222 = vxor.u32 %v221, 2147483648
    %v223 = vsel %vm140, %v222, %v221
    %v224 = vsub.s32 4, %v200
    %v225 = vsel %vm140, %v224, %v200
    %v226 = vsel %vm139, %v33, %v223
    %v227 = vsel %vm139, 0, %v225
    %v228 = vcosq.f32.pop %v226
    %v229 = vsinq.f32.pop %v226
    %vm230 = vweird.f32 %v33
    %v231 = vand.u32 %v227, 3
    %vm232 = vcmp.lt.s32.totalorder %v231, 2
    %vm233 = vcmp.eq.s32.totalorder %v231, 0
    %v234 = vxor.u32 %v229, 2147483648
    %v235 = vsel %vm233, %v228, %v234
    %vm236 = vcmp.eq.s32.totalorder %v231, 2
    %v237 = vxor.u32 %v228, 2147483648
    %v238 = vsel %vm236, %v237, %v229
    %v239 = vsel %vm232, %v235, %v238
    %v240 = vsel %vm230, nan, %v239
    %241 = vset.pattern.permute.xlu0 1
    %242 = vperm.xlu0 %241, %v27
    %v243 = vpop.permute.xlu0 %242
    %v245 = vmul.f32 %v243, %v26
    %v246 = vand.u32 2147483647, %v245
    %vm247 = vcmp.le.f32.partialorder %v246, 0.7853982
    %vm248 = vcmp.lt.s32.totalorder %v245, 0
    %v249 = vand.u32 %v245, 2139095040
    %v250 = vshrl.u32 %v249, 23
    %v251 = vsub.s32 %v250, 127
    %v252 = vand.u32 2147483647, %v245
    %v253 = vand.u32 %v252, 8388607
    %v254 = vor.u32 %v253, 8388608
    %v255 = vsub.s32 0, %v254
    %v256 = vadd.s32 %v251, 1
    %vm257 = vcmp.gt.s32.totalorder %v256, 0
    %v258 = vsel %vm257, %v256, 0
    %v259 = vshrl.u32 %v258, 5
    %v260 = vand.u32 %v258, 31
    %v261 = vsub.s32 32, %v260
    %v262 = vshrl.u32 683565275, %v261
    %v263 = vshll.u32 683565275, %v260
    %v264 = vshrl.u32 2475754826, %v261
    %v265 = vor.u32 %v263, %v264
    %v266 = vshll.u32 2475754826, %v260
    %v267 = vshrl.u32 2131351028, %v261
    %v268 = vor.u32 %v266, %v267
    %v269 = vshll.u32 2131351028, %v260
    %v270 = vshrl.u32 2102212464, %v261
    %v271 = vor.u32 %v269, %v270
    %v272 = vshll.u32 2102212464, %v260
    %v273 = vshrl.u32 920167782, %v261
    %v274 = vor.u32 %v272, %v273
    %v275 = vshll.u32 920167782, %v260
    %v276 = vshrl.u32 1326507024, %v261
    %v277 = vor.u32 %v275, %v276
    %vm278 = vcmp.lt.s32.totalorder %v259, 1
    %vm279 = vcmp.lt.s32.totalorder %v259, 2
    %vm280 = vcmp.lt.s32.totalorder %v259, 3
    %vm281 = vcmp.lt.s32.totalorder %v259, 4
    %v282 = vsel %vm278, %v262, %v265
    %v283 = vsel %vm281, %v271, 2102212464
    %v284 = vsel %vm280, %v268, %v283
    %v285 = vsel %vm279, %v282, %v284
    %v286 = vsel %vm278, %v265, %v268
    %v287 = vsel %vm281, %v274, 920167782
    %v288 = vsel %vm280, %v271, %v287
    %v289 = vsel %vm279, %v286, %v288
    %v290 = vsel %vm278, %v268, %v271
    %v291 = vsel %vm281, %v277, 1326507024
    %v292 = vsel %vm280, %v274, %v291
    %v293 = vsel %vm279, %v290, %v292
    %v294 = vshll.u32 %v254, 8
    %v295 = vmul.u32.u64.compose %v294, %v293
    %v296 = vextract.low.u32 %v295
    %v297 = vextract.high.u32 %v295
    %v298 = vmul.u32.u64.compose %v294, %v289
    %v299 = vextract.low.u32 %v298
    %v300 = vextract.high.u32 %v298
    %v301 = vmul.u32 %v294, %v285
    %v302 = vadd.s32 %v297, %v299
    %vm303 = vc.u32 %v297, %v299
    %v304 = vadd.s32 %v300, 1
    %v305 = vsel %vm303, %v304, %v300
    %v306 = vadd.s32 %v301, %v305
    %v307 = vadd.s32 %v306, 536870912
    %v308 = vshrl.u32 %v307, 30
    %v309 = vshll.u32 %v308, 30
    %v310 = vsub.s32 %v306, %v309
    %vm311 = vcmp.lt.s32.totalorder %v310, 0
    %v312 = vsub.s32 0, %v310
    %v313 = vsel %vm311, %v312, %v310
    %v314 = vclz %v313
    %v315 = vsub.s32 %v314, 2
    %vm316 = vcmp.gt.s32.totalorder 0, %v315
    %v317 = vsel %vm316, 0, %v315
    %v318 = vsub.s32 32, %v317
    %v319 = vshll.u32 %v310, %v317
    %v320 = vshrl.u32 %v302, %v318
    %v321 = vor.u32 %v319, %v320
    %v322 = vsub.s32 4294967266, %v317
    %v323 = vadd.s32 %v322, 127
    %v324 = vshll.u32 %v323, 23
    %v325 = vor.u32 4788187, %v324
    %v326 = vand.u32 2147483647, %v325
    %v328 = vcvt.s32.f32 %v321
    %v329 = vmul.f32 %v328, %v326
    %v330 = vxor.u32 %v329, 2147483648
    %v331 = vsel %vm248, %v330, %v329
    %v332 = vsub.s32 4, %v308
    %v333 = vsel %vm248, %v332, %v308
    %v334 = vsel %vm247, %v245, %v331
    %v335 = vsel %vm247, 0, %v333
    %v336 = vcosq.f32.pop %v334
    %v337 = vsinq.f32.pop %v334
    %vm338 = vweird.f32 %v245
    %v339 = vadd.s32 %v335, 3
    %v340 = vand.u32 %v339, 3
    %vm341 = vcmp.lt.s32.totalorder %v340, 2
    %vm342 = vcmp.eq.s32.totalorder %v340, 0
    %v343 = vxor.u32 %v337, 2147483648
    %v344 = vsel %vm342, %v336, %v343
    %vm345 = vcmp.eq.s32.totalorder %v340, 2
    %v346 = vxor.u32 %v336, 2147483648
    %v347 = vsel %vm345, %v346, %v337
    %v348 = vsel %vm341, %v344, %v347
    %v349 = vsel %vm338, nan, %v348
    %v350 = vand.u32 2147483647, %v245
    %vm351 = vcmp.le.f32.partialorder %v350, 0.7853982
    %vm352 = vcmp.lt.s32.totalorder %v245, 0
    %v353 = vand.u32 %v245, 2139095040
    %v354 = vshrl.u32 %v353, 23
    %v355 = vsub.s32 %v354, 127
    %v356 = vand.u32 2147483647, %v245
    %v357 = vand.u32 %v356, 8388607
    %v358 = vor.u32 %v357, 8388608
    %v359 = vsub.s32 0, %v358
    %v360 = vadd.s32 %v355, 1
    %vm361 = vcmp.gt.s32.totalorder %v360, 0
    %v362 = vsel %vm361, %v360, 0
    %v363 = vshrl.u32 %v362, 5
    %v364 = vand.u32 %v362, 31
    %v365 = vsub.s32 32, %v364
    %v366 = vshrl.u32 683565275, %v365
    %v367 = vshll.u32 683565275, %v364
    %v368 = vshrl.u32 2475754826, %v365
    %v369 = vor.u32 %v367, %v368
    %v370 = vshll.u32 2475754826, %v364
    %v371 = vshrl.u32 2131351028, %v365
    %v372 = vor.u32 %v370, %v371
    %v373 = vshll.u32 2131351028, %v364
    %v374 = vshrl.u32 2102212464, %v365
    %v375 = vor.u32 %v373, %v374
    %v376 = vshll.u32 2102212464, %v364
    %v377 = vshrl.u32 920167782, %v365
    %v378 = vor.u32 %v376, %v377
    %v379 = vshll.u32 920167782, %v364
    %v380 = vshrl.u32 1326507024, %v365
    %v381 = vor.u32 %v379, %v380
    %vm382 = vcmp.lt.s32.totalorder %v363, 1
    %vm383 = vcmp.lt.s32.totalorder %v363, 2
    %vm384 = vcmp.lt.s32.totalorder %v363, 3
    %vm385 = vcmp.lt.s32.totalorder %v363, 4
    %v386 = vsel %vm382, %v366, %v369
    %v387 = vsel %vm385, %v375, 2102212464
    %v388 = vsel %vm384, %v372, %v387
    %v389 = vsel %vm383, %v386, %v388
    %v390 = vsel %vm382, %v369, %v372
    %v391 = vsel %vm385, %v378, 920167782
    %v392 = vsel %vm384, %v375, %v391
    %v393 = vsel %vm383, %v390, %v392
    %v394 = vsel %vm382, %v372, %v375
    %v395 = vsel %vm385, %v381, 1326507024
    %v396 = vsel %vm384, %v378, %v395
    %v397 = vsel %vm383, %v394, %v396
    %v398 = vshll.u32 %v358, 8
    %v399 = vmul.u32.u64.compose %v398, %v397
    %v400 = vextract.low.u32 %v399
    %v401 = vextract.high.u32 %v399
    %v402 = vmul.u32.u64.compose %v398, %v393
    %v403 = vextract.low.u32 %v402
    %v404 = vextract.high.u32 %v402
    %v405 = vmul.u32 %v398, %v389
    %v406 = vadd.s32 %v401, %v403
    %vm407 = vc.u32 %v401, %v403
    %v408 = vadd.s32 %v404, 1
    %v409 = vsel %vm407, %v408, %v404
    %v410 = vadd.s32 %v405, %v409
    %v411 = vadd.s32 %v410, 536870912
    %v412 = vshrl.u32 %v411, 30
    %v413 = vshll.u32 %v412, 30
    %v414 = vsub.s32 %v410, %v413
    %vm415 = vcmp.lt.s32.totalorder %v414, 0
    %v416 = vsub.s32 0, %v414
    %v417 = vsel %vm415, %v416, %v414
    %v418 = vclz %v417
    %v419 = vsub.s32 %v418, 2
    %vm420 = vcmp.gt.s32.totalorder 0, %v419
    %v421 = vsel %vm420, 0, %v419
    %v422 = vsub.s32 32, %v421
    %v423 = vshll.u32 %v414, %v421
    %v424 = vshrl.u32 %v406, %v422
    %v425 = vor.u32 %v423, %v424
    %v426 = vsub.s32 4294967266, %v421
    %v427 = vadd.s32 %v426, 127
    %v428 = vshll.u32 %v427, 23
    %v429 = vor.u32 4788187, %v428
    %v430 = vand.u32 2147483647, %v429
    %v432 = vcvt.s32.f32 %v425
    %v433 = vmul.f32 %v432, %v430
    %v434 = vxor.u32 %v433, 2147483648
    %v435 = vsel %vm352, %v434, %v433
    %v436 = vsub.s32 4, %v412
    %v437 = vsel %vm352, %v436, %v412
    %v438 = vsel %vm351, %v245, %v435
    %v439 = vsel %vm351, 0, %v437
    %v440 = vcosq.f32.pop %v438
    %v441 = vsinq.f32.pop %v438
    %vm442 = vweird.f32 %v245
    %v443 = vand.u32 %v439, 3
    %vm444 = vcmp.lt.s32.totalorder %v443, 2
    %vm445 = vcmp.eq.s32.totalorder %v443, 0
    %v446 = vxor.u32 %v441, 2147483648
    %v447 = vsel %vm445, %v440, %v446
    %vm448 = vcmp.eq.s32.totalorder %v443, 2
    %v449 = vxor.u32 %v440, 2147483648
    %v450 = vsel %vm448, %v449, %v441
    %v451 = vsel %vm444, %v447, %v450
    %v452 = vsel %vm442, nan, %v451
    %453 = vset.pattern.permute.xlu0 2
    %454 = vperm.xlu0 %453, %v27
    %v455 = vpop.permute.xlu0 %454
    %v457 = vmul.f32 %v455, %v26
    %v458 = vand.u32 2147483647, %v457
    %vm459 = vcmp.le.f32.partialorder %v458, 0.7853982
    %vm460 = vcmp.lt.s32.totalorder %v457, 0
    %v461 = vand.u32 %v457, 2139095040
    %v462 = vshrl.u32 %v461, 23
    %v463 = vsub.s32 %v462, 127
    %v464 = vand.u32 2147483647, %v457
    %v465 = vand.u32 %v464, 8388607
    %v466 = vor.u32 %v465, 8388608
    %v467 = vsub.s32 0, %v466
    %v468 = vadd.s32 %v463, 1
    %vm469 = vcmp.gt.s32.totalorder %v468, 0
    %v470 = vsel %vm469, %v468, 0
    %v471 = vshrl.u32 %v470, 5
    %v472 = vand.u32 %v470, 31
    %v473 = vsub.s32 32, %v472
    %v474 = vshrl.u32 683565275, %v473
    %v475 = vshll.u32 683565275, %v472
    %v476 = vshrl.u32 2475754826, %v473
    %v477 = vor.u32 %v475, %v476
    %v478 = vshll.u32 2475754826, %v472
    %v479 = vshrl.u32 2131351028, %v473
    %v480 = vor.u32 %v478, %v479
    %v481 = vshll.u32 2131351028, %v472
    %v482 = vshrl.u32 2102212464, %v473
    %v483 = vor.u32 %v481, %v482
    %v484 = vshll.u32 2102212464, %v472
    %v485 = vshrl.u32 920167782, %v473
    %v486 = vor.u32 %v484, %v485
    %v487 = vshll.u32 920167782, %v472
    %v488 = vshrl.u32 1326507024, %v473
    %v489 = vor.u32 %v487, %v488
    %vm490 = vcmp.lt.s32.totalorder %v471, 1
    %vm491 = vcmp.lt.s32.totalorder %v471, 2
    %vm492 = vcmp.lt.s32.totalorder %v471, 3
    %vm493 = vcmp.lt.s32.totalorder %v471, 4
    %v494 = vsel %vm490, %v474, %v477
    %v495 = vsel %vm493, %v483, 2102212464
    %v496 = vsel %vm492, %v480, %v495
    %v497 = vsel %vm491, %v494, %v496
    %v498 = vsel %vm490, %v477, %v480
    %v499 = vsel %vm493, %v486, 920167782
    %v500 = vsel %vm492, %v483, %v499
    %v501 = vsel %vm491, %v498, %v500
    %v502 = vsel %vm490, %v480, %v483
    %v503 = vsel %vm493, %v489, 1326507024
    %v504 = vsel %vm492, %v486, %v503
    %v505 = vsel %vm491, %v502, %v504
    %v506 = vshll.u32 %v466, 8
    %v507 = vmul.u32.u64.compose %v506, %v505
    %v508 = vextract.low.u32 %v507
    %v509 = vextract.high.u32 %v507
    %v510 = vmul.u32.u64.compose %v506, %v501
    %v511 = vextract.low.u32 %v510
    %v512 = vextract.high.u32 %v510
    %v513 = vmul.u32 %v506, %v497
    %v514 = vadd.s32 %v509, %v511
    %vm515 = vc.u32 %v509, %v511
    %v516 = vadd.s32 %v512, 1
    %v517 = vsel %vm515, %v516, %v512
    %v518 = vadd.s32 %v513, %v517
    %v519 = vadd.s32 %v518, 536870912
    %v520 = vshrl.u32 %v519, 30
    %v521 = vshll.u32 %v520, 30
    %v522 = vsub.s32 %v518, %v521
    %vm523 = vcmp.lt.s32.totalorder %v522, 0
    %v524 = vsub.s32 0, %v522
    %v525 = vsel %vm523, %v524, %v522
    %v526 = vclz %v525
    %v527 = vsub.s32 %v526, 2
    %vm528 = vcmp.gt.s32.totalorder 0, %v527
    %v529 = vsel %vm528, 0, %v527
    %v530 = vsub.s32 32, %v529
    %v531 = vshll.u32 %v522, %v529
    %v532 = vshrl.u32 %v514, %v530
    %v533 = vor.u32 %v531, %v532
    %v534 = vsub.s32 4294967266, %v529
    %v535 = vadd.s32 %v534, 127
    %v536 = vshll.u32 %v535, 23
    %v537 = vor.u32 4788187, %v536
    %v538 = vand.u32 2147483647, %v537
    %v540 = vcvt.s32.f32 %v533
    %v541 = vmul.f32 %v540, %v538
    %v542 = vxor.u32 %v541, 2147483648
    %v543 = vsel %vm460, %v542, %v541
    %v544 = vsub.s32 4, %v520
    %v545 = vsel %vm460, %v544, %v520
    %v546 = vsel %vm459, %v457, %v543
    %v547 = vsel %vm459, 0, %v545
    %v548 = vcosq.f32.pop %v546
    %v549 = vsinq.f32.pop %v546
    %vm550 = vweird.f32 %v457
    %v551 = vadd.s32 %v547, 3
    %v552 = vand.u32 %v551, 3
    %vm553 = vcmp.lt.s32.totalorder %v552, 2
    %vm554 = vcmp.eq.s32.totalorder %v552, 0
    %v555 = vxor.u32 %v549, 2147483648
    %v556 = vsel %vm554, %v548, %v555
    %vm557 = vcmp.eq.s32.totalorder %v552, 2
    %v558 = vxor.u32 %v548, 2147483648
    %v559 = vsel %vm557, %v558, %v549
    %v560 = vsel %vm553, %v556, %v559
    %v561 = vsel %vm550, nan, %v560
    %v562 = vand.u32 2147483647, %v457
    %vm563 = vcmp.le.f32.partialorder %v562, 0.7853982
    %vm564 = vcmp.lt.s32.totalorder %v457, 0
    %v565 = vand.u32 %v457, 2139095040
    %v566 = vshrl.u32 %v565, 23
    %v567 = vsub.s32 %v566, 127
    %v568 = vand.u32 2147483647, %v457
    %v569 = vand.u32 %v568, 8388607
    %v570 = vor.u32 %v569, 8388608
    %v571 = vsub.s32 0, %v570
    %v572 = vadd.s32 %v567, 1
    %vm573 = vcmp.gt.s32.totalorder %v572, 0
    %v574 = vsel %vm573, %v572, 0
    %v575 = vshrl.u32 %v574, 5
    %v576 = vand.u32 %v574, 31
    %v577 = vsub.s32 32, %v576
    %v578 = vshrl.u32 683565275, %v577
    %v579 = vshll.u32 683565275, %v576
    %v580 = vshrl.u32 2475754826, %v577
    %v581 = vor.u32 %v579, %v580
    %v582 = vshll.u32 2475754826, %v576
    %v583 = vshrl.u32 2131351028, %v577
    %v584 = vor.u32 %v582, %v583
    %v585 = vshll.u32 2131351028, %v576
    %v586 = vshrl.u32 2102212464, %v577
    %v587 = vor.u32 %v585, %v586
    %v588 = vshll.u32 2102212464, %v576
    %v589 = vshrl.u32 920167782, %v577
    %v590 = vor.u32 %v588, %v589
    %v591 = vshll.u32 920167782, %v576
    %v592 = vshrl.u32 1326507024, %v577
    %v593 = vor.u32 %v591, %v592
    %vm594 = vcmp.lt.s32.totalorder %v575, 1
    %vm595 = vcmp.lt.s32.totalorder %v575, 2
    %vm596 = vcmp.lt.s32.totalorder %v575, 3
    %vm597 = vcmp.lt.s32.totalorder %v575, 4
    %v598 = vsel %vm594, %v578, %v581
    %v599 = vsel %vm597, %v587, 2102212464
    %v600 = vsel %vm596, %v584, %v599
    %v601 = vsel %vm595, %v598, %v600
    %v602 = vsel %vm594, %v581, %v584
    %v603 = vsel %vm597, %v590, 920167782
    %v604 = vsel %vm596, %v587, %v603
    %v605 = vsel %vm595, %v602, %v604
    %v606 = vsel %vm594, %v584, %v587
    %v607 = vsel %vm597, %v593, 1326507024
    %v608 = vsel %vm596, %v590, %v607
    %v609 = vsel %vm595, %v606, %v608
    %v610 = vshll.u32 %v570, 8
    %v611 = vmul.u32.u64.compose %v610, %v609
    %v612 = vextract.low.u32 %v611
    %v613 = vextract.high.u32 %v611
    %v614 = vmul.u32.u64.compose %v610, %v605
    %v615 = vextract.low.u32 %v614
    %v616 = vextract.high.u32 %v614
    %v617 = vmul.u32 %v610, %v601
    %v618 = vadd.s32 %v613, %v615
    %vm619 = vc.u32 %v613, %v615
    %v620 = vadd.s32 %v616, 1
    %v621 = vsel %vm619, %v620, %v616
    %v622 = vadd.s32 %v617, %v621
    %v623 = vadd.s32 %v622, 536870912
    %v624 = vshrl.u32 %v623, 30
    %v625 = vshll.u32 %v624, 30
    %v626 = vsub.s32 %v622, %v625
    %vm627 = vcmp.lt.s32.totalorder %v626, 0
    %v628 = vsub.s32 0, %v626
    %v629 = vsel %vm627, %v628, %v626
    %v630 = vclz %v629
    %v631 = vsub.s32 %v630, 2
    %vm632 = vcmp.gt.s32.totalorder 0, %v631
    %v633 = vsel %vm632, 0, %v631
    %v634 = vsub.s32 32, %v633
    %v635 = vshll.u32 %v626, %v633
    %v636 = vshrl.u32 %v618, %v634
    %v637 = vor.u32 %v635, %v636
    %v638 = vsub.s32 4294967266, %v633
    %v639 = vadd.s32 %v638, 127
    %v640 = vshll.u32 %v639, 23
    %v641 = vor.u32 4788187, %v640
    %v642 = vand.u32 2147483647, %v641
    %v644 = vcvt.s32.f32 %v637
    %v645 = vmul.f32 %v644, %v642
    %v646 = vxor.u32 %v645, 2147483648
    %v647 = vsel %vm564, %v646, %v645
    %v648 = vsub.s32 4, %v624
    %v649 = vsel %vm564, %v648, %v624
    %v650 = vsel %vm563, %v457, %v647
    %v651 = vsel %vm563, 0, %v649
    %v652 = vcosq.f32.pop %v650
    %v653 = vsinq.f32.pop %v650
    %vm654 = vweird.f32 %v457
    %v655 = vand.u32 %v651, 3
    %vm656 = vcmp.lt.s32.totalorder %v655, 2
    %vm657 = vcmp.eq.s32.totalorder %v655, 0
    %v658 = vxor.u32 %v653, 2147483648
    %v659 = vsel %vm657, %v652, %v658
    %vm660 = vcmp.eq.s32.totalorder %v655, 2
    %v661 = vxor.u32 %v652, 2147483648
    %v662 = vsel %vm660, %v661, %v653
    %v663 = vsel %vm656, %v659, %v662
    %v664 = vsel %vm654, nan, %v663
    %665 = vset.pattern.permute.xlu0 3
    %666 = vperm.xlu0 %665, %v27
    %v667 = vpop.permute.xlu0 %666
    %v669 = vmul.f32 %v667, %v26
    %v670 = vand.u32 2147483647, %v669
    %vm671 = vcmp.le.f32.partialorder %v670, 0.7853982
    %vm672 = vcmp.lt.s32.totalorder %v669, 0
    %v673 = vand.u32 %v669, 2139095040
    %v674 = vshrl.u32 %v673, 23
    %v675 = vsub.s32 %v674, 127
    %v676 = vand.u32 2147483647, %v669
    %v677 = vand.u32 %v676, 8388607
    %v678 = vor.u32 %v677, 8388608
    %v679 = vsub.s32 0, %v678
    %v680 = vadd.s32 %v675, 1
    %vm681 = vcmp.gt.s32.totalorder %v680, 0
    %v682 = vsel %vm681, %v680, 0
    %v683 = vshrl.u32 %v682, 5
    %v684 = vand.u32 %v682, 31
    %v685 = vsub.s32 32, %v684
    %v686 = vshrl.u32 683565275, %v685
    %v687 = vshll.u32 683565275, %v684
    %v688 = vshrl.u32 2475754826, %v685
    %v689 = vor.u32 %v687, %v688
    %v690 = vshll.u32 2475754826, %v684
    %v691 = vshrl.u32 2131351028, %v685
    %v692 = vor.u32 %v690, %v691
    %v693 = vshll.u32 2131351028, %v684
    %v694 = vshrl.u32 2102212464, %v685
    %v695 = vor.u32 %v693, %v694
    %v696 = vshll.u32 2102212464, %v684
    %v697 = vshrl.u32 920167782, %v685
    %v698 = vor.u32 %v696, %v697
    %v699 = vshll.u32 920167782, %v684
    %v700 = vshrl.u32 1326507024, %v685
    %v701 = vor.u32 %v699, %v700
    %vm702 = vcmp.lt.s32.totalorder %v683, 1
    %vm703 = vcmp.lt.s32.totalorder %v683, 2
    %vm704 = vcmp.lt.s32.totalorder %v683, 3
    %vm705 = vcmp.lt.s32.totalorder %v683, 4
    %v706 = vsel %vm702, %v686, %v689
    %v707 = vsel %vm705, %v695, 2102212464
    %v708 = vsel %vm704, %v692, %v707
    %v709 = vsel %vm703, %v706, %v708
    %v710 = vsel %vm702, %v689, %v692
    %v711 = vsel %vm705, %v698, 920167782
    %v712 = vsel %vm704, %v695, %v711
    %v713 = vsel %vm703, %v710, %v712
    %v714 = vsel %vm702, %v692, %v695
    %v715 = vsel %vm705, %v701, 1326507024
    %v716 = vsel %vm704, %v698, %v715
    %v717 = vsel %vm703, %v714, %v716
    %v718 = vshll.u32 %v678, 8
    %v719 = vmul.u32.u64.compose %v718, %v717
    %v720 = vextract.low.u32 %v719
    %v721 = vextract.high.u32 %v719
    %v722 = vmul.u32.u64.compose %v718, %v713
    %v723 = vextract.low.u32 %v722
    %v724 = vextract.high.u32 %v722
    %v725 = vmul.u32 %v718, %v709
    %v726 = vadd.s32 %v721, %v723
    %vm727 = vc.u32 %v721, %v723
    %v728 = vadd.s32 %v724, 1
    %v729 = vsel %vm727, %v728, %v724
    %v730 = vadd.s32 %v725, %v729
    %v731 = vadd.s32 %v730, 536870912
    %v732 = vshrl.u32 %v731, 30
    %v733 = vshll.u32 %v732, 30
    %v734 = vsub.s32 %v730, %v733
    %vm735 = vcmp.lt.s32.totalorder %v734, 0
    %v736 = vsub.s32 0, %v734
    %v737 = vsel %vm735, %v736, %v734
    %v738 = vclz %v737
    %v739 = vsub.s32 %v738, 2
    %vm740 = vcmp.gt.s32.totalorder 0, %v739
    %v741 = vsel %vm740, 0, %v739
    %v742 = vsub.s32 32, %v741
    %v743 = vshll.u32 %v734, %v741
    %v744 = vshrl.u32 %v726, %v742
    %v745 = vor.u32 %v743, %v744
    %v746 = vsub.s32 4294967266, %v741
    %v747 = vadd.s32 %v746, 127
    %v748 = vshll.u32 %v747, 23
    %v749 = vor.u32 4788187, %v748
    %v750 = vand.u32 2147483647, %v749
    %v752 = vcvt.s32.f32 %v745
    %v753 = vmul.f32 %v752, %v750
    %v754 = vxor.u32 %v753, 2147483648
    %v755 = vsel %vm672, %v754, %v753
    %v756 = vsub.s32 4, %v732
    %v757 = vsel %vm672, %v756, %v732
    %v758 = vsel %vm671, %v669, %v755
    %v759 = vsel %vm671, 0, %v757
    %v760 = vcosq.f32.pop %v758
    %v761 = vsinq.f32.pop %v758
    %vm762 = vweird.f32 %v669
    %v763 = vadd.s32 %v759, 3
    %v764 = vand.u32 %v763, 3
    %vm765 = vcmp.lt.s32.totalorder %v764, 2
    %vm766 = vcmp.eq.s32.totalorder %v764, 0
    %v767 = vxor.u32 %v761, 2147483648
    %v768 = vsel %vm766, %v760, %v767
    %vm769 = vcmp.eq.s32.totalorder %v764, 2
    %v770 = vxor.u32 %v760, 2147483648
    %v771 = vsel %vm769, %v770, %v761
    %v772 = vsel %vm765, %v768, %v771
    %v773 = vsel %vm762, nan, %v772
    %v774 = vand.u32 2147483647, %v669
    %vm775 = vcmp.le.f32.partialorder %v774, 0.7853982
    %vm776 = vcmp.lt.s32.totalorder %v669, 0
    %v777 = vand.u32 %v669, 2139095040
    %v778 = vshrl.u32 %v777, 23
    %v779 = vsub.s32 %v778, 127
    %v780 = vand.u32 2147483647, %v669
    %v781 = vand.u32 %v780, 8388607
    %v782 = vor.u32 %v781, 8388608
    %v783 = vsub.s32 0, %v782
    %v784 = vadd.s32 %v779, 1
    %vm785 = vcmp.gt.s32.totalorder %v784, 0
    %v786 = vsel %vm785, %v784, 0
    %v787 = vshrl.u32 %v786, 5
    %v788 = vand.u32 %v786, 31
    %v789 = vsub.s32 32, %v788
    %v790 = vshrl.u32 683565275, %v789
    %v791 = vshll.u32 683565275, %v788
    %v792 = vshrl.u32 2475754826, %v789
    %v793 = vor.u32 %v791, %v792
    %v794 = vshll.u32 2475754826, %v788
    %v795 = vshrl.u32 2131351028, %v789
    %v796 = vor.u32 %v794, %v795
    %v797 = vshll.u32 2131351028, %v788
    %v798 = vshrl.u32 2102212464, %v789
    %v799 = vor.u32 %v797, %v798
    %v800 = vshll.u32 2102212464, %v788
    %v801 = vshrl.u32 920167782, %v789
    %v802 = vor.u32 %v800, %v801
    %v803 = vshll.u32 920167782, %v788
    %v804 = vshrl.u32 1326507024, %v789
    %v805 = vor.u32 %v803, %v804
    %vm806 = vcmp.lt.s32.totalorder %v787, 1
    %vm807 = vcmp.lt.s32.totalorder %v787, 2
    %vm808 = vcmp.lt.s32.totalorder %v787, 3
    %vm809 = vcmp.lt.s32.totalorder %v787, 4
    %v810 = vsel %vm806, %v790, %v793
    %v811 = vsel %vm809, %v799, 2102212464
    %v812 = vsel %vm808, %v796, %v811
    %v813 = vsel %vm807, %v810, %v812
    %v814 = vsel %vm806, %v793, %v796
    %v815 = vsel %vm809, %v802, 920167782
    %v816 = vsel %vm808, %v799, %v815
    %v817 = vsel %vm807, %v814, %v816
    %v818 = vsel %vm806, %v796, %v799
    %v819 = vsel %vm809, %v805, 1326507024
    %v820 = vsel %vm808, %v802, %v819
    %v821 = vsel %vm807, %v818, %v820
    %v822 = vshll.u32 %v782, 8
    %v823 = vmul.u32.u64.compose %v822, %v821
    %v824 = vextract.low.u32 %v823
    %v825 = vextract.high.u32 %v823
    %v826 = vmul.u32.u64.compose %v822, %v817
    %v827 = vextract.low.u32 %v826
    %v828 = vextract.high.u32 %v826
    %v829 = vmul.u32 %v822, %v813
    %v830 = vadd.s32 %v825, %v827
    %vm831 = vc.u32 %v825, %v827
    %v832 = vadd.s32 %v828, 1
    %v833 = vsel %vm831, %v832, %v828
    %v834 = vadd.s32 %v829, %v833
    %v835 = vadd.s32 %v834, 536870912
    %v836 = vshrl.u32 %v835, 30
    %v837 = vshll.u32 %v836, 30
    %v838 = vsub.s32 %v834, %v837
    %vm839 = vcmp.lt.s32.totalorder %v838, 0
    %v840 = vsub.s32 0, %v838
    %v841 = vsel %vm839, %v840, %v838
    %v842 = vclz %v841
    %v843 = vsub.s32 %v842, 2
    %vm844 = vcmp.gt.s32.totalorder 0, %v843
    %v845 = vsel %vm844, 0, %v843
    %v846 = vsub.s32 32, %v845
    %v847 = vshll.u32 %v838, %v845
    %v848 = vshrl.u32 %v830, %v846
    %v849 = vor.u32 %v847, %v848
    %v850 = vsub.s32 4294967266, %v845
    %v851 = vadd.s32 %v850, 127
    %v852 = vshll.u32 %v851, 23
    %v853 = vor.u32 4788187, %v852
    %v854 = vand.u32 2147483647, %v853
    %v856 = vcvt.s32.f32 %v849
    %v857 = vmul.f32 %v856, %v854
    %v858 = vxor.u32 %v857, 2147483648
    %v859 = vsel %vm776, %v858, %v857
    %v860 = vsub.s32 4, %v836
    %v861 = vsel %vm776, %v860, %v836
    %v862 = vsel %vm775, %v669, %v859
    %v863 = vsel %vm775, 0, %v861
    %v864 = vcosq.f32.pop %v862
    %v865 = vsinq.f32.pop %v862
    %vm866 = vweird.f32 %v669
    %v867 = vand.u32 %v863, 3
    %vm868 = vcmp.lt.s32.totalorder %v867, 2
    %vm869 = vcmp.eq.s32.totalorder %v867, 0
    %v870 = vxor.u32 %v865, 2147483648
    %v871 = vsel %vm869, %v864, %v870
    %vm872 = vcmp.eq.s32.totalorder %v867, 2
    %v873 = vxor.u32 %v864, 2147483648
    %v874 = vsel %vm872, %v873, %v865
    %v875 = vsel %vm868, %v871, %v874
    %v876 = vsel %vm866, nan, %v875
    %878 = vrot.lane.b32.xlu0 %v240, 16
    %v879 = vpop.permute.xlu0 %878
    %882 = vrot.lane.b32.xlu0 %v349, 32
    %v883 = vpop.permute.xlu0 %882
    %886 = vrot.lane.b32.xlu0 %v452, 48
    %v887 = vpop.permute.xlu0 %886
    %890 = vrot.lane.b32.xlu0 %v561, 64
    %v891 = vpop.permute.xlu0 %890
    %894 = vrot.lane.b32.xlu0 %v664, 80
    %v895 = vpop.permute.xlu0 %894
    %898 = vrot.lane.b32.xlu0 %v773, 96
    %v899 = vpop.permute.xlu0 %898
    %902 = vrot.lane.b32.xlu0 %v876, 112
    %v903 = vpop.permute.xlu0 %902
    %vm905 = vcmask 130048
    %v906 = vsel %vm905, %v137, %v879
    %vm907 = vcmask 261120
    %v908 = vsel %vm907, %v906, %v883
    %vm909 = vcmask 392192
    %v910 = vsel %vm909, %v908, %v887
    %vm911 = vcmask 523264
    %v912 = vsel %vm911, %v910, %v891
    %vm913 = vcmask 654336
    %v914 = vsel %vm913, %v912, %v895
    %vm915 = vcmask 785408
    %v916 = vsel %vm915, %v914, %v899
    %vm917 = vcmask 916480
    %v918 = vsel %vm917, %v916, %v903
    %919 = vst [vmem:[#allocation5] sm:$0x3] %v918
    // Predicated region
    $region10: #{tpu_custom_call.1} parent=1 // pred_check
      _
    $region11: #{tpu_custom_call.1} parent=1 // pred_check_branch
      %921 = sbr.rel (0) target = $region13
    $region12: #{tpu_custom_call.1} parent=1 // pred_region
      %s923 = ssub.s32 32, 32
      %924 = vsyncadd [#allocation4], %s923
      %s926 = sshll.u32 [#allocation5], 4
      %s927 = int_to_ptr.vmem [resolvable:$true] %s926
      %929 = dma.vmem_to_hbm [thread:$0]  %s927, 32, %s1, [#allocation4]
    $region13: #{tpu_custom_call.1} parent=1 // pred_fallthru
      _
    // Predicated region
    $region14: #{tpu_custom_call.1} parent=1 // pred_check
      _
    $region15: #{tpu_custom_call.1} parent=1 // pred_check_branch
      %931 = sbr.rel (0) target = $region17
    $region16: #{tpu_custom_call.1} parent=1 // pred_region
      %932 = dma.done [#allocation4], 32
    $region17: #{tpu_custom_call.1} parent=1 // pred_fallthru
      _
    %933 = vsyncpa [#allocation3], 1
    %934 = vsyncpa [#allocation4], 1

</llo_original>
